<compile_context>
chip_gen: v6e
topology: v6e:2x2x1
jax: 0.10.0
libtpu: 0.0.40
codegen_flags: <defaults>
</compile_context>

<pallas_src>
import jax
import jax.numpy as jnp
from jax.experimental import pallas as pl
from jax.experimental.pallas import tpu as pltpu

_LANE = 128      # lane width: output last dim padded to a multiple of this
_SUBLANE = 8     # sublane granularity: batch tile rounded to a multiple of this


def _round_up(n, m):
    return ((n + m - 1) // m) * m


def _linear_kernel(x_ref, w_ref, b_ref, o_ref):
    # MXU matmul in bf16 with f32 accumulation, then f32 bias add (VPU).
    acc = jnp.dot(x_ref[...], w_ref[...], preferred_element_type=jnp.float32)
    o_ref[...] = (acc + b_ref[...]).astype(o_ref.dtype)


def logistic_regression_forward(x, w_t_pad, b_pad, num_class, *, block_rows=512):
    """Compute x @ w_t + b using a batch-tiled Pallas kernel.

    x:        (B, D) float32
    w_t_pad:  (D, Cp) float32, Cp = round_up(num_class, 128), padded cols are 0
    b_pad:    (1, Cp) float32, padded cols are 0
    Returns (B, num_class) float32 logits.
    """
    B, D = x.shape
    Dw, Cp = w_t_pad.shape
    assert Dw == D
    assert Cp % _LANE == 0

    # Batch tile: multiple of 8 sublanes, at most `block_rows` rows.
    TB = min(block_rows, _round_up(B, _SUBLANE))
    B_pad = _round_up(B, TB)

    # bf16 inputs for the MXU; zero-pad the batch so the grid tiles exactly.
    x_bf = x.astype(jnp.bfloat16)
    if B_pad != B:
        x_bf = jnp.pad(x_bf, ((0, B_pad - B), (0, 0)))
    w_bf = w_t_pad.astype(jnp.bfloat16)

    grid = (B_pad // TB,)

    out_pad = pl.pallas_call(
        _linear_kernel,
        out_shape=jax.ShapeDtypeStruct((B_pad, Cp), jnp.float32),
        grid_spec=pl.GridSpec(
            grid=grid,
            in_specs=[
                pl.BlockSpec((TB, D), lambda i: (i, 0)),   # x tile streams over B
                pl.BlockSpec((D, Cp), lambda i: (0, 0)),   # weights VMEM-resident
                pl.BlockSpec((1, Cp), lambda i: (0, 0)),   # bias VMEM-resident
            ],
            out_specs=pl.BlockSpec((TB, Cp), lambda i: (i, 0)),
        ),
        compiler_params=pltpu.CompilerParams(
            dimension_semantics=("parallel",),  # batch tiles are independent
        ),
    )(x_bf, w_bf, b_pad)

    return out_pad[:B, :num_class]


class LogisticRegressionPallas:
    """Mirror of the PyTorch LogisticRegression module (Linear forward)."""

    def __init__(self, num_dim, num_class, key):
        self.num_dim = num_dim
        self.num_class = num_class
        kw, kb = jax.random.split(key)
        # torch.nn.Linear default init: U(-1/sqrt(fan_in), 1/sqrt(fan_in)).
        bound = 1.0 / jnp.sqrt(jnp.float32(num_dim))
        # Weight stored already transposed: (num_dim, num_class), f32 master copy.
        self.w_t = jax.random.uniform(
            kw, (num_dim, num_class), jnp.float32, -bound, bound
        )
        self.b = jax.random.uniform(kb, (1, num_class), jnp.float32, -bound, bound)

        # Lane-dense padded copies for the kernel (pad C up to a multiple of 128).
        c_pad = _round_up(num_class, _LANE)
        self.w_t_pad = jnp.pad(self.w_t, ((0, 0), (0, c_pad - num_class)))
        self.b_pad = jnp.pad(self.b, ((0, 0), (0, c_pad - num_class)))

    def __call__(self, g, x, *args):
        # `g` (graph) is unused in the reference forward; kept for signature parity.
        return logistic_regression_forward(x, self.w_t_pad, self.b_pad, self.num_class)


def _check(model, x, atol_f32=5e-2):
    logits = model(None, x)
    jax.block_until_ready(logits)
    assert logits.shape == (x.shape[0], model.num_class)
    # Tight check: same bf16-rounded inputs, f32 accumulate (matches kernel math).
    x_q = x.astype(jnp.bfloat16).astype(jnp.float32)
    w_q = model.w_t.astype(jnp.bfloat16).astype(jnp.float32)
    ref_bf = x_q @ w_q + model.b
    assert jnp.allclose(logits, ref_bf, atol=1e-3, rtol=1e-3)
    # Loose check against the full-f32 PyTorch-equivalent reference.
    ref_f32 = x @ model.w_t + model.b
    assert jnp.allclose(logits, ref_f32, atol=atol_f32, rtol=atol_f32)
    return logits


if __name__ == "__main__":
    key = jax.random.PRNGKey(0)
    k_model, k_x1, k_x2 = jax.random.split(key, 3)

    NUM_DIM, NUM_CLASS = 32, 16
    model = LogisticRegressionPallas(NUM_DIM, NUM_CLASS, k_model)

    # Small case (single tile).
    x_small = jax.random.normal(k_x1, (8, NUM_DIM), jnp.float32)
    _check(model, x_small)

    # Larger, non-multiple batch to exercise batch tiling + padding (grid > 1).
    x_big = jax.random.normal(k_x2, (1030, NUM_DIM), jnp.float32)
    _check(model, x_big)

    print("KERNEL_OK")
</pallas_src>

<mosaic_0001>
module attributes {stable_mosaic.version = 11 : i64} {
  func.func @_linear_kernel(%arg0: i32, %arg1: memref<8x32xbf16, #tpu.memory_space<vmem>>, %arg2: memref<32x128xbf16, #tpu.memory_space<vmem>>, %arg3: memref<1x128xf32, #tpu.memory_space<vmem>>, %arg4: memref<8x128xf32, #tpu.memory_space<vmem>>) attributes {dimension_semantics = [#tpu.dimension_semantics<parallel>], iteration_bounds = array<i64: 1>, scalar_prefetch = 0 : i64, scratch_operands = 0 : i64, tpu.core_type = #tpu.core_type<tc>, window_params = [{transform_indices = @transform_0, window_bounds = array<i64: 8, 32>}, {pipeline_mode = #tpu.pipeline_mode<synchronous>, transform_indices = @transform_1, window_bounds = array<i64: 32, 128>}, {pipeline_mode = #tpu.pipeline_mode<synchronous>, transform_indices = @transform_2, window_bounds = array<i64: 1, 128>}, {transform_indices = @transform_3, window_bounds = array<i64: 8, 128>}]} {
    %c0 = arith.constant 0 : index
    %c0_0 = arith.constant 0 : index
    %0 = vector.load %arg1[%c0, %c0_0] : memref<8x32xbf16, #tpu.memory_space<vmem>>, vector<8x32xbf16>
    %c0_1 = arith.constant 0 : index
    %c0_2 = arith.constant 0 : index
    %1 = vector.load %arg2[%c0_1, %c0_2] : memref<32x128xbf16, #tpu.memory_space<vmem>>, vector<32x128xbf16>
    %cst = arith.constant dense<0.000000e+00> : vector<8x128xf32>
    %2 = tpu.matmul %0, %1, %cst {dimension_numbers = #tpu.dot_dimension_numbers<[1], [0], [0], [1], [0, 0, 1, 1], [], []>} : vector<8x32xbf16>, vector<32x128xbf16>, vector<8x128xf32> -> vector<8x128xf32>
    %c0_3 = arith.constant 0 : index
    %c0_4 = arith.constant 0 : index
    %3 = vector.load %arg3[%c0_3, %c0_4] : memref<1x128xf32, #tpu.memory_space<vmem>>, vector<1x128xf32>
    %4 = vector.broadcast %3 : vector<1x128xf32> to vector<8x128xf32>
    %5 = arith.addf %2, %4 : vector<8x128xf32>
    %c0_5 = arith.constant 0 : index
    %c0_6 = arith.constant 0 : index
    %6 = vector.load %arg4[%c0_5, %c0_6] : memref<8x128xf32, #tpu.memory_space<vmem>>, vector<8x128xf32>
    tpu.vector_store %arg4[%c0_5, %c0_6], %5 {strides = array<i32>} : memref<8x128xf32, #tpu.memory_space<vmem>>, vector<8x128xf32>,
    return
  }
  func.func @transform_0(%arg0: i32) -> (i32, i32) {
    %c0_i32 = arith.constant 0 : i32
    %c0_i32_0 = arith.constant 0 : i32
    return %arg0, %c0_i32 : i32, i32
  }
  func.func @transform_1(%arg0: i32) -> (i32, i32) {
    %c0_i32 = arith.constant 0 : i32
    %c0_i32_0 = arith.constant 0 : i32
    %c0_i32_1 = arith.constant 0 : i32
    return %c0_i32, %c0_i32_0 : i32, i32
  }
  func.func @transform_2(%arg0: i32) -> (i32, i32) {
    %c0_i32 = arith.constant 0 : i32
    %c0_i32_0 = arith.constant 0 : i32
    %c0_i32_1 = arith.constant 0 : i32
    return %c0_i32, %c0_i32_0 : i32, i32
  }
  func.func @transform_3(%arg0: i32) -> (i32, i32) {
    %c0_i32 = arith.constant 0 : i32
    %c0_i32_0 = arith.constant 0 : i32
    return %arg0, %c0_i32 : i32, i32
  }
}

</mosaic_0001>

<llo_original>
// kernel: tpu_custom_call.1
$region0: #{tpu_custom_call.1}
  #allocation0 [shape = 'u32[]', space=smem, size = 0x4, offset = 0x4, fixed_abs, tag = 'smem constant byte address 0x4 - core index']
  #allocation1 [shape = 'u32[144,128]{1,0:T(1,128)}', space=vmem, size = 0x12000, scoped, tag = 'internal scratch']
  %s0 = inlined_call_operand.hbm [shape: bf16[8,32], index: 0, kind: input, shape index: {}]
  %s1 = inlined_call_operand.hbm [shape: bf16[32,128], index: 1, kind: input, shape index: {}]
  %s2 = inlined_call_operand.vmem [shape: f32[1,128], index: 2, kind: input, shape index: {}]
  %s3 = inlined_call_operand.hbm [shape: f32[8,128], index: 3, kind: output, shape index: {}]
  %s4 = sld [smem:[#allocation0]]
  $region30: #{tpu_custom_call.1} parent=0
    _
  %s6 = ssub.s32 1, %s4
  %s7 = scalar_select 0, %s6, %s4
  $region1: #{tpu_custom_call.1} parent=0
    #allocation2 [shape = 'u8[2048]{0}', space=vmem, size = 0x800, scoped, tag = 'input window, operand 0, single buffered']
    #allocation3 [shape = 's32[1]{0}', space=sflag, size = 0x4, scoped, tag = 'scoped memory for tpu_custom_call.1']
    #allocation4 [shape = 's32[1]{0}', space=sflag, size = 0x4, scoped, tag = 'scoped memory for tpu_custom_call.1']
    #allocation5 [shape = 'u8[8192]{0}', space=vmem, size = 0x2000, scoped, tag = 'input window, operand 1, single buffered']
    #allocation6 [shape = 's32[1]{0}', space=sflag, size = 0x4, scoped, tag = 'scoped memory for tpu_custom_call.1']
    #allocation7 [shape = 'u8[4096]{0}', space=vmem, size = 0x1000, scoped, tag = 'output window, operand 0, single buffered']
    %8 = vsyncpa [#allocation3], 0
    %9 = vsyncpa [#allocation6], 0
    %10 = vsyncpa [#allocation4], 0
    // Predicated region
    $region2: #{tpu_custom_call.1} parent=1 // pred_check
      _
    $region3: #{tpu_custom_call.1} parent=1 // pred_check_branch
      %12 = sbr.rel (0) target = $region5
    $region4: #{tpu_custom_call.1} parent=1 // pred_region
      %s14 = ssub.s32 64, 64
      %15 = vsyncadd [#allocation3], %s14
      %s17 = sshll.u32 [#allocation2], 4
      %s18 = int_to_ptr.vmem [resolvable:$true] %s17
      %20 = dma.hbm_to_vmem [thread:$0]  %s0, 64, %s18, [#allocation3]
    $region5: #{tpu_custom_call.1} parent=1 // pred_fallthru
      _
    // Predicated region
    $region6: #{tpu_custom_call.1} parent=1 // pred_check
      _
    $region7: #{tpu_custom_call.1} parent=1 // pred_check_branch
      %22 = sbr.rel (0) target = $region9
    $region8: #{tpu_custom_call.1} parent=1 // pred_region
      %s24 = ssub.s32 256, 256
      %25 = vsyncadd [#allocation6], %s24
      %s26 = sshll.u32 [#allocation5], 4
      %s27 = int_to_ptr.vmem [resolvable:$true] %s26
      %32 = dma.hbm_to_vmem [thread:$0]  %s1, 256, %s27, [#allocation6], 64, 64, 4
    $region9: #{tpu_custom_call.1} parent=1 // pred_fallthru
      _
    // Predicated region
    $region10: #{tpu_custom_call.1} parent=1 // pred_check
      _
    $region11: #{tpu_custom_call.1} parent=1 // pred_check_branch
      %34 = sbr.rel (0) target = $region13
    $region12: #{tpu_custom_call.1} parent=1 // pred_region
      _
    $region13: #{tpu_custom_call.1} parent=1 // pred_fallthru
      _
    // Predicated region
    $region14: #{tpu_custom_call.1} parent=1 // pred_check
      _
    $region15: #{tpu_custom_call.1} parent=1 // pred_check_branch
      %36 = sbr.rel (0) target = $region17
    $region16: #{tpu_custom_call.1} parent=1 // pred_region
      %37 = dma.done [#allocation3], 64
    $region17: #{tpu_custom_call.1} parent=1 // pred_fallthru
      _
    // Predicated region
    $region18: #{tpu_custom_call.1} parent=1 // pred_check
      _
    $region19: #{tpu_custom_call.1} parent=1 // pred_check_branch
      %39 = sbr.rel (0) target = $region21
    $region20: #{tpu_custom_call.1} parent=1 // pred_region
      %40 = dma.done [#allocation6], 256
    $region21: #{tpu_custom_call.1} parent=1 // pred_fallthru
      _
    %v42 = vld [vmem:[#allocation2] sm:$0xf]
    %v43 = vld [vmem:[#allocation5] sm:$0xf]
    %v44 = vld [vmem:[#allocation5 + $0x4] sm:$0xf]
    %v45 = vld [vmem:[#allocation5 + $0x8] sm:$0xf]
    %v46 = vld [vmem:[#allocation5 + $0xc] sm:$0xf]
    %v47 = vld [vmem:[%s2] sm:$0x1]
    %v49 = vlaneseq
    %v50 = vshrl.u32 %v49, 7
    %v51 = vsub.s32 0, %v50
    %v52 = vrot.slane %v47, %v51
    %v58 = vunpack.c.l.b16 %v43
    %v59 = vunpack.c.l.b16 %v44
    %v60 = vunpack.c.l.b16 %v45
    %v61 = vunpack.c.l.b16 %v46
    %v62 = vpack.c.b16 %v59, %v58
    %v63 = vpack.c.b16 %v61, %v60
    %vm66 = vcmask 261120
    %v68 = vsel %vm66, %v42, 0
    %70 = vmatprep.subr.bf16.mxu0 0
    %71 = vmatpush1.bf16.msra.mxu0 0
    %72 = vmatprep.subr.bf16.mxu0 0
    %73 = vmatpush1.bf16.msra.mxu0 0
    %74 = vmatprep.subr.bf16.mxu0 0
    %75 = vmatpush1.bf16.msra.mxu0 0
    %76 = vmatprep.subr.bf16.mxu0 0
    %77 = vmatpush1.bf16.msra.mxu0 0
    %78 = vmatprep.subr.bf16.mxu0 0
    %79 = vmatpush1.bf16.msra.mxu0 0
    %80 = vmatprep.subr.bf16.mxu0 0
    %81 = vmatpush1.bf16.msra.mxu0 0
    %82 = vmatprep.subr.bf16.mxu0 0
    %83 = vmatpush1.bf16.msra.mxu0 %v63
    %84 = vmatprep.subr.bf16.mxu0 0
    %85 = vmatpush1.bf16.msra.mxu0 %v62
    %86 = vmatprep.subr.bf16.mxu0 0
    %87 = vmatpush2.bf16.msra.mxu0 0
    %88 = vmatprep.subr.bf16.mxu0 0
    %89 = vmatpush2.bf16.msra.mxu0 0
    %90 = vmatprep.subr.bf16.mxu0 0
    %91 = vmatpush2.bf16.msra.mxu0 0
    %92 = vmatprep.subr.bf16.mxu0 0
    %93 = vmatpush2.bf16.msra.mxu0 0
    %94 = vmatprep.subr.bf16.mxu0 0
    %95 = vmatpush2.bf16.msra.mxu0 0
    %96 = vmatprep.subr.bf16.mxu0 0
    %97 = vmatpush2.bf16.msra.mxu0 0
    %98 = vmatprep.subr.bf16.mxu0 0
    %99 = vmatpush2.bf16.msra.mxu0 0
    %100 = vmatprep.subr.bf16.mxu0 0
    %101 = vmatpush2.bf16.msra.mxu0 0
    %102 = vmatprep.mubr.bf16.mxu0 0
    %103 = vmatmul.mubr.bf16.gmra.mxu0 %v68
    %v104 = vpop.f32.mrf.mxu0
    %v105 = vadd.f32 %v52, %v104
    %v106 = vpop.f32.mrf.mxu0
    %v107 = vpop.f32.mrf.mxu0
    %v108 = vpop.f32.mrf.mxu0
    %109 = vdwg.mxu0
    %110 = vst [vmem:[#allocation7] sm:$0xff] %v105
    // Predicated region
    $region22: #{tpu_custom_call.1} parent=1 // pred_check
      _
    $region23: #{tpu_custom_call.1} parent=1 // pred_check_branch
      %112 = sbr.rel (0) target = $region25
    $region24: #{tpu_custom_call.1} parent=1 // pred_region
      %s114 = ssub.s32 128, 128
      %115 = vsyncadd [#allocation4], %s114
      %s117 = sshll.u32 [#allocation7], 4
      %s118 = int_to_ptr.vmem [resolvable:$true] %s117
      %120 = dma.vmem_to_hbm [thread:$0]  %s118, 128, %s3, [#allocation4]
    $region25: #{tpu_custom_call.1} parent=1 // pred_fallthru
      _
    // Predicated region
    $region26: #{tpu_custom_call.1} parent=1 // pred_check
      _
    $region27: #{tpu_custom_call.1} parent=1 // pred_check_branch
      %122 = sbr.rel (0) target = $region29
    $region28: #{tpu_custom_call.1} parent=1 // pred_region
      %123 = dma.done [#allocation4], 128
    $region29: #{tpu_custom_call.1} parent=1 // pred_fallthru
      _
    %124 = vsyncpa [#allocation3], 1
    %125 = vsyncpa [#allocation6], 1
    %126 = vsyncpa [#allocation4], 1

</llo_original>
